<compile_context>
chip_gen: v6e
topology: v6e:2x2x1
jax: 0.10.0
libtpu: 0.0.40
codegen_flags: <defaults>
</compile_context>

<pallas_src>
import numpy as np
import jax
import jax.numpy as jnp
from jax.experimental import pallas as pl
from jax.experimental.pallas import tpu as pltpu

EPS = 1e-5  # PyTorch BatchNorm default eps


# ------------------------------- Pallas kernel -------------------------------

def fused_forward_kernel(x_ref, w0_ref, t0_ref, w1_ref, t1_ref,
                         w2_ref, t2_ref, w3_ref, b3_ref, o_ref):
    # conv (expressed as unfold matmul) + BatchNorm2d(eval) folded + relu
    x = x_ref[...].astype(jnp.bfloat16)
    h = jnp.dot(x, w0_ref[...], preferred_element_type=jnp.float32)
    h = jnp.maximum(h + t0_ref[...], 0.0)
    # hidden1 + BatchNorm1d(256) folded + relu
    # TODO(synk): nn.Dropout is identity in eval mode; training-mode dropout not implemented.
    h = jnp.dot(h.astype(jnp.bfloat16), w1_ref[...], preferred_element_type=jnp.float32)
    h = jnp.maximum(h + t1_ref[...], 0.0)
    # hidden2 + BatchNorm1d(128) folded + relu
    h = jnp.dot(h.astype(jnp.bfloat16), w2_ref[...], preferred_element_type=jnp.float32)
    h = jnp.maximum(h + t2_ref[...], 0.0)
    # output linear (columns padded 3 -> 8 for a tiny lane-aligned store) + sigmoid
    logits = jnp.dot(h.astype(jnp.bfloat16), w3_ref[...],
                     preferred_element_type=jnp.float32) + b3_ref[...]
    o_ref[...] = jax.nn.sigmoid(logits)


# --------------------------- trace-time weight prep ---------------------------

def _prepare_weights(p):
    """Fold permute+conv+flatten into an unfold matrix and BN scales into weights."""
    # W_unfold[(ow+kw)*25 + (oh+kh)*5 + c, o*9 + oh*3 + ow] = conv_w[o, c, kh, kw]
    # (row index is over the raw x layout (w, h, c); column order matches
    #  torch.flatten of the NCHW conv output.)
    o_i, oh_i, ow_i, c_i, kh_i, kw_i = np.meshgrid(
        np.arange(16), np.arange(3), np.arange(3),
        np.arange(5), np.arange(3), np.arange(3), indexing='ij')
    row = ((ow_i + kw_i) * 25 + (oh_i + kh_i) * 5 + c_i).ravel()
    col = (o_i * 9 + oh_i * 3 + ow_i).ravel()
    vals = p['conv_w'][o_i, c_i, kh_i, kw_i].ravel().astype(jnp.float32)
    w_unfold = jnp.zeros((125, 144), jnp.float32).at[row, col].set(vals)

    # Fold conv bias + BatchNorm2d (eval: running stats) into (scale, shift); scale -> weights.
    sc = p['bn_conv_gamma'] * jax.lax.rsqrt(p['bn_conv_var'] + EPS)
    tc = (p['conv_b'] - p['bn_conv_mean']) * sc + p['bn_conv_beta']
    w0 = (w_unfold * jnp.repeat(sc, 9)[None, :]).astype(jnp.bfloat16)
    t0 = jnp.repeat(tc, 9).reshape(1, 144).astype(jnp.float32)

    s1 = p['bn1_gamma'] * jax.lax.rsqrt(p['bn1_var'] + EPS)
    w1 = (p['h1_w'].T * s1[None, :]).astype(jnp.bfloat16)
    t1 = ((p['h1_b'] - p['bn1_mean']) * s1 + p['bn1_beta']).reshape(1, 256).astype(jnp.float32)

    s2 = p['bn2_gamma'] * jax.lax.rsqrt(p['bn2_var'] + EPS)
    w2 = (p['h2_w'].T * s2[None, :]).astype(jnp.bfloat16)
    t2 = ((p['h2_b'] - p['bn2_mean']) * s2 + p['bn2_beta']).reshape(1, 128).astype(jnp.float32)

    # Output layer padded 3 -> 8 lanes (padded lanes give sigmoid(0)=0.5, sliced off in wrapper).
    w3 = jnp.zeros((128, 8), jnp.float32).at[:, :3].set(p['out_w'].T).astype(jnp.bfloat16)
    b3 = jnp.zeros((1, 8), jnp.float32).at[0, :3].set(p['out_b'])
    return w0, t0, w1, t1, w2, t2, w3, b3


# ------------------------------ forward wrapper -------------------------------

def cnn_iter4_forward(x, p):
    """x: (N, 5, 5, 5) float32 — same (N, W, H, C) layout the PyTorch module receives."""
    n = x.shape[0]
    # permute + conv + flatten are absorbed into W_unfold's index ordering, so the
    # activation side is just a flat, copy-free reshape to (N, 125).
    x_flat = x.reshape(n, 125).astype(jnp.float32)

    # Batch tile: multiple of 8, capped at 1024, and capped at ceil(N/2) (rounded
    # up to 8) so the grid has >= 2 steps whenever possible (v7x megacore).
    if n <= 8:
        tile_n = n                       # single block, equal to the full dim
    else:
        half = -(-n // 2)
        tile_n = min(1024, ((half + 7) // 8) * 8)
    grid = (pl.cdiv(n, tile_n),)         # ragged last block masked by Pallas

    w0, t0, w1, t1, w2, t2, w3, b3 = _prepare_weights(p)

    def full(shape):
        return pl.BlockSpec(shape, lambda i: (0, 0))

    flops_per_row = 2 * (125 * 144 + 144 * 256 + 256 * 128 + 128 * 8)
    weight_elems = 125 * 144 + 144 * 256 + 256 * 128 + 128 * 8
    cost = pl.CostEstimate(
        flops=flops_per_row * n,
        transcendentals=8 * n,
        bytes_accessed=n * (125 * 4 + 8 * 4) + weight_elems * 2 + (144 + 256 + 128 + 8) * 4,
    )

    out = pl.pallas_call(
        fused_forward_kernel,
        out_shape=jax.ShapeDtypeStruct((n, 8), jnp.float32),
        grid=grid,
        in_specs=[
            pl.BlockSpec((tile_n, 125), lambda i: (i, 0)),   # activations, tiled on batch
            full((125, 144)), full((1, 144)),                # conv-as-matmul weight / shift
            full((144, 256)), full((1, 256)),                # hidden1 / shift
            full((256, 128)), full((1, 128)),                # hidden2 / shift
            full((128, 8)), full((1, 8)),                    # output (3 padded to 8) / bias
        ],
        out_specs=pl.BlockSpec((tile_n, 8), lambda i: (i, 0)),
        compiler_params=pltpu.CompilerParams(
            dimension_semantics=("parallel",),
            vmem_limit_bytes=32 * 1024 * 1024),
        cost_estimate=cost,
    )(x_flat, w0, t0, w1, t1, w2, t2, w3, b3)

    return out[:, :3]


# ----------------------------- pure-JAX reference -----------------------------

def reference_forward(x, p):
    xp = jnp.transpose(x, (0, 3, 2, 1))
    y = jax.lax.conv_general_dilated(xp, p['conv_w'], (1, 1), 'VALID',
                                     dimension_numbers=('NCHW', 'OIHW', 'NCHW'))
    y = y + p['conv_b'][None, :, None, None]
    y = ((y - p['bn_conv_mean'][None, :, None, None])
         / jnp.sqrt(p['bn_conv_var'] + EPS)[None, :, None, None]
         * p['bn_conv_gamma'][None, :, None, None]
         + p['bn_conv_beta'][None, :, None, None])
    y = jnp.maximum(y, 0.0)
    y = y.reshape(y.shape[0], -1)

    def lin_bn_relu(z, w, b, g, bt, m, v):
        z = z @ w.T + b
        z = (z - m) / jnp.sqrt(v + EPS) * g + bt
        return jnp.maximum(z, 0.0)

    y = lin_bn_relu(y, p['h1_w'], p['h1_b'], p['bn1_gamma'], p['bn1_beta'],
                    p['bn1_mean'], p['bn1_var'])
    y = lin_bn_relu(y, p['h2_w'], p['h2_b'], p['bn2_gamma'], p['bn2_beta'],
                    p['bn2_mean'], p['bn2_var'])
    y = y @ p['out_w'].T + p['out_b']
    return jax.nn.sigmoid(y)


# ----------------------------------- main -------------------------------------

def init_params(key):
    ks = jax.random.split(key, 16)
    u = lambda k, shape, lo, hi: jax.random.uniform(k, shape, jnp.float32, lo, hi)
    return {
        'conv_w': 0.1 * jax.random.normal(ks[0], (16, 5, 3, 3), jnp.float32),
        'conv_b': 0.1 * jax.random.normal(ks[1], (16,), jnp.float32),
        'bn_conv_gamma': u(ks[2], (16,), 0.5, 1.5),
        'bn_conv_beta': 0.1 * jax.random.normal(ks[3], (16,), jnp.float32),
        'bn_conv_mean': 0.1 * jax.random.normal(ks[4], (16,), jnp.float32),
        'bn_conv_var': u(ks[5], (16,), 0.5, 1.5),
        'h1_w': 0.05 * jax.random.normal(ks[6], (256, 144), jnp.float32),
        'h1_b': 0.05 * jax.random.normal(ks[7], (256,), jnp.float32),
        'bn1_gamma': u(ks[8], (256,), 0.5, 1.5),
        'bn1_beta': 0.05 * jax.random.normal(ks[9], (256,), jnp.float32),
        'bn1_mean': 0.05 * jax.random.normal(ks[10], (256,), jnp.float32),
        'bn1_var': u(ks[11], (256,), 0.5, 1.5),
        'h2_w': 0.05 * jax.random.normal(ks[12], (128, 256), jnp.float32),
        'h2_b': 0.05 * jax.random.normal(ks[13], (128,), jnp.float32),
        'bn2_gamma': jnp.ones((128,), jnp.float32),
        'bn2_beta': jnp.zeros((128,), jnp.float32),
        'bn2_mean': jnp.zeros((128,), jnp.float32),
        'bn2_var': jnp.ones((128,), jnp.float32),
        'out_w': 0.1 * jax.random.normal(ks[14], (3, 128), jnp.float32),
        'out_b': 0.1 * jax.random.normal(ks[15], (3,), jnp.float32),
    }


if __name__ == "__main__":
    key = jax.random.PRNGKey(0)
    kx, kp = jax.random.split(key)
    params = init_params(kp)

    # Input shape implied by the module: permute(0,3,2,1) feeds Conv2d(in=5, k=3) and
    # flatten -> 144 = 16*3*3, so spatial is 5x5 and channels (last dim) = 5.
    x = jax.random.normal(kx, (2, 5, 5, 5), jnp.float32)

    out = jax.block_until_ready(cnn_iter4_forward(x, params))
    ref = jax.block_until_ready(reference_forward(x, params))

    assert out.shape == (2, 3), out.shape
    # bf16 matmul operands -> relaxed tolerance vs the f32 reference.
    assert jnp.allclose(out, ref, atol=2e-2, rtol=2e-2), (out, ref)
    print("KERNEL_OK")
</pallas_src>

<mosaic_0001>
module attributes {stable_mosaic.version = 11 : i64} {
  func.func @fused_forward_kernel(%arg0: i32, %arg1: memref<2x125xf32, #tpu.memory_space<vmem>>, %arg2: memref<125x144xbf16, #tpu.memory_space<vmem>>, %arg3: memref<1x144xf32, #tpu.memory_space<vmem>>, %arg4: memref<144x256xbf16, #tpu.memory_space<vmem>>, %arg5: memref<1x256xf32, #tpu.memory_space<vmem>>, %arg6: memref<256x128xbf16, #tpu.memory_space<vmem>>, %arg7: memref<1x128xf32, #tpu.memory_space<vmem>>, %arg8: memref<128x8xbf16, #tpu.memory_space<vmem>>, %arg9: memref<1x8xf32, #tpu.memory_space<vmem>>, %arg10: memref<2x8xf32, #tpu.memory_space<vmem>>) attributes {dimension_semantics = [#tpu.dimension_semantics<parallel>], iteration_bounds = array<i64: 1>, scalar_prefetch = 0 : i64, scratch_operands = 0 : i64, tpu.core_type = #tpu.core_type<tc>, window_params = [{transform_indices = @transform_0, window_bounds = array<i64: 2, 125>}, {pipeline_mode = #tpu.pipeline_mode<synchronous>, transform_indices = @transform_1, window_bounds = array<i64: 125, 144>}, {pipeline_mode = #tpu.pipeline_mode<synchronous>, transform_indices = @transform_2, window_bounds = array<i64: 1, 144>}, {pipeline_mode = #tpu.pipeline_mode<synchronous>, transform_indices = @transform_3, window_bounds = array<i64: 144, 256>}, {pipeline_mode = #tpu.pipeline_mode<synchronous>, transform_indices = @transform_4, window_bounds = array<i64: 1, 256>}, {pipeline_mode = #tpu.pipeline_mode<synchronous>, transform_indices = @transform_5, window_bounds = array<i64: 256, 128>}, {pipeline_mode = #tpu.pipeline_mode<synchronous>, transform_indices = @transform_6, window_bounds = array<i64: 1, 128>}, {pipeline_mode = #tpu.pipeline_mode<synchronous>, transform_indices = @transform_7, window_bounds = array<i64: 128, 8>}, {pipeline_mode = #tpu.pipeline_mode<synchronous>, transform_indices = @transform_8, window_bounds = array<i64: 1, 8>}, {transform_indices = @transform_9, window_bounds = array<i64: 2, 8>}]} {
    %c0 = arith.constant 0 : index
    %c0_0 = arith.constant 0 : index
    %0 = vector.load %arg1[%c0, %c0_0] : memref<2x125xf32, #tpu.memory_space<vmem>>, vector<2x125xf32>
    %1 = arith.truncf %0 : vector<2x125xf32> to vector<2x125xbf16>
    %c0_1 = arith.constant 0 : index
    %c0_2 = arith.constant 0 : index
    %2 = vector.load %arg2[%c0_1, %c0_2] : memref<125x144xbf16, #tpu.memory_space<vmem>>, vector<125x144xbf16>
    %cst = arith.constant dense<0.000000e+00> : vector<2x144xf32>
    %3 = tpu.matmul %1, %2, %cst {dimension_numbers = #tpu.dot_dimension_numbers<[1], [0], [0], [1], [0, 0, 1, 1], [], []>} : vector<2x125xbf16>, vector<125x144xbf16>, vector<2x144xf32> -> vector<2x144xf32>
    %c0_3 = arith.constant 0 : index
    %c0_4 = arith.constant 0 : index
    %4 = vector.load %arg3[%c0_3, %c0_4] : memref<1x144xf32, #tpu.memory_space<vmem>>, vector<1x144xf32>
    %5 = vector.broadcast %4 : vector<1x144xf32> to vector<2x144xf32>
    %6 = arith.addf %3, %5 : vector<2x144xf32>
    %cst_5 = arith.constant 0.000000e+00 : f32
    %7 = vector.broadcast %cst_5 : f32 to vector<2x144xf32>
    %8 = arith.maximumf %6, %7 : vector<2x144xf32>
    %9 = arith.truncf %8 : vector<2x144xf32> to vector<2x144xbf16>
    %c0_6 = arith.constant 0 : index
    %c0_7 = arith.constant 0 : index
    %10 = vector.load %arg4[%c0_6, %c0_7] : memref<144x256xbf16, #tpu.memory_space<vmem>>, vector<144x256xbf16>
    %cst_8 = arith.constant dense<0.000000e+00> : vector<2x256xf32>
    %11 = tpu.matmul %9, %10, %cst_8 {dimension_numbers = #tpu.dot_dimension_numbers<[1], [0], [0], [1], [0, 0, 1, 1], [], []>} : vector<2x144xbf16>, vector<144x256xbf16>, vector<2x256xf32> -> vector<2x256xf32>
    %c0_9 = arith.constant 0 : index
    %c0_10 = arith.constant 0 : index
    %12 = vector.load %arg5[%c0_9, %c0_10] : memref<1x256xf32, #tpu.memory_space<vmem>>, vector<1x256xf32>
    %13 = vector.broadcast %12 : vector<1x256xf32> to vector<2x256xf32>
    %14 = arith.addf %11, %13 : vector<2x256xf32>
    %cst_11 = arith.constant 0.000000e+00 : f32
    %15 = vector.broadcast %cst_11 : f32 to vector<2x256xf32>
    %16 = arith.maximumf %14, %15 : vector<2x256xf32>
    %17 = arith.truncf %16 : vector<2x256xf32> to vector<2x256xbf16>
    %c0_12 = arith.constant 0 : index
    %c0_13 = arith.constant 0 : index
    %18 = vector.load %arg6[%c0_12, %c0_13] : memref<256x128xbf16, #tpu.memory_space<vmem>>, vector<256x128xbf16>
    %cst_14 = arith.constant dense<0.000000e+00> : vector<2x128xf32>
    %19 = tpu.matmul %17, %18, %cst_14 {dimension_numbers = #tpu.dot_dimension_numbers<[1], [0], [0], [1], [0, 0, 1, 1], [], []>} : vector<2x256xbf16>, vector<256x128xbf16>, vector<2x128xf32> -> vector<2x128xf32>
    %c0_15 = arith.constant 0 : index
    %c0_16 = arith.constant 0 : index
    %20 = vector.load %arg7[%c0_15, %c0_16] : memref<1x128xf32, #tpu.memory_space<vmem>>, vector<1x128xf32>
    %21 = vector.broadcast %20 : vector<1x128xf32> to vector<2x128xf32>
    %22 = arith.addf %19, %21 : vector<2x128xf32>
    %cst_17 = arith.constant 0.000000e+00 : f32
    %23 = vector.broadcast %cst_17 : f32 to vector<2x128xf32>
    %24 = arith.maximumf %22, %23 : vector<2x128xf32>
    %25 = arith.truncf %24 : vector<2x128xf32> to vector<2x128xbf16>
    %c0_18 = arith.constant 0 : index
    %c0_19 = arith.constant 0 : index
    %26 = vector.load %arg8[%c0_18, %c0_19] : memref<128x8xbf16, #tpu.memory_space<vmem>>, vector<128x8xbf16>
    %cst_20 = arith.constant dense<0.000000e+00> : vector<2x8xf32>
    %27 = tpu.matmul %25, %26, %cst_20 {dimension_numbers = #tpu.dot_dimension_numbers<[1], [0], [0], [1], [0, 0, 1, 1], [], []>} : vector<2x128xbf16>, vector<128x8xbf16>, vector<2x8xf32> -> vector<2x8xf32>
    %c0_21 = arith.constant 0 : index
    %c0_22 = arith.constant 0 : index
    %28 = vector.load %arg9[%c0_21, %c0_22] : memref<1x8xf32, #tpu.memory_space<vmem>>, vector<1x8xf32>
    %29 = vector.broadcast %28 : vector<1x8xf32> to vector<2x8xf32>
    %30 = arith.addf %27, %29 : vector<2x8xf32>
    %31 = arith.negf %30 : vector<2x8xf32>
    %32 = math.exp %31 : vector<2x8xf32>
    %cst_23 = arith.constant 1.000000e+00 : f32
    %33 = vector.broadcast %cst_23 : f32 to vector<2x8xf32>
    %34 = arith.addf %33, %32 : vector<2x8xf32>
    %35 = arith.divf %33, %34 : vector<2x8xf32>
    %c0_24 = arith.constant 0 : index
    %c0_25 = arith.constant 0 : index
    %36 = vector.load %arg10[%c0_24, %c0_25] : memref<2x8xf32, #tpu.memory_space<vmem>>, vector<2x8xf32>
    tpu.vector_store %arg10[%c0_24, %c0_25], %35 {strides = array<i32>} : memref<2x8xf32, #tpu.memory_space<vmem>>, vector<2x8xf32>,
    return
  }
  func.func @transform_0(%arg0: i32) -> (i32, i32) {
    %c0_i32 = arith.constant 0 : i32
    %c0_i32_0 = arith.constant 0 : i32
    return %arg0, %c0_i32 : i32, i32
  }
  func.func @transform_1(%arg0: i32) -> (i32, i32) {
    %c0_i32 = arith.constant 0 : i32
    %c0_i32_0 = arith.constant 0 : i32
    %c0_i32_1 = arith.constant 0 : i32
    return %c0_i32, %c0_i32_0 : i32, i32
  }
  func.func @transform_2(%arg0: i32) -> (i32, i32) {
    %c0_i32 = arith.constant 0 : i32
    %c0_i32_0 = arith.constant 0 : i32
    %c0_i32_1 = arith.constant 0 : i32
    return %c0_i32, %c0_i32_0 : i32, i32
  }
  func.func @transform_3(%arg0: i32) -> (i32, i32) {
    %c0_i32 = arith.constant 0 : i32
    %c0_i32_0 = arith.constant 0 : i32
    %c0_i32_1 = arith.constant 0 : i32
    return %c0_i32, %c0_i32_0 : i32, i32
  }
  func.func @transform_4(%arg0: i32) -> (i32, i32) {
    %c0_i32 = arith.constant 0 : i32
    %c0_i32_0 = arith.constant 0 : i32
    %c0_i32_1 = arith.constant 0 : i32
    return %c0_i32, %c0_i32_0 : i32, i32
  }
  func.func @transform_5(%arg0: i32) -> (i32, i32) {
    %c0_i32 = arith.constant 0 : i32
    %c0_i32_0 = arith.constant 0 : i32
    %c0_i32_1 = arith.constant 0 : i32
    return %c0_i32, %c0_i32_0 : i32, i32
  }
  func.func @transform_6(%arg0: i32) -> (i32, i32) {
    %c0_i32 = arith.constant 0 : i32
    %c0_i32_0 = arith.constant 0 : i32
    %c0_i32_1 = arith.constant 0 : i32
    return %c0_i32, %c0_i32_0 : i32, i32
  }
  func.func @transform_7(%arg0: i32) -> (i32, i32) {
    %c0_i32 = arith.constant 0 : i32
    %c0_i32_0 = arith.constant 0 : i32
    %c0_i32_1 = arith.constant 0 : i32
    return %c0_i32, %c0_i32_0 : i32, i32
  }
  func.func @transform_8(%arg0: i32) -> (i32, i32) {
    %c0_i32 = arith.constant 0 : i32
    %c0_i32_0 = arith.constant 0 : i32
    %c0_i32_1 = arith.constant 0 : i32
    return %c0_i32, %c0_i32_0 : i32, i32
  }
  func.func @transform_9(%arg0: i32) -> (i32, i32) {
    %c0_i32 = arith.constant 0 : i32
    %c0_i32_0 = arith.constant 0 : i32
    return %arg0, %c0_i32 : i32, i32
  }
}

</mosaic_0001>

<llo_original>
// kernel: tpu_custom_call.1
$region0: #{tpu_custom_call.1}
  #allocation0 [shape = 'u32[]', space=smem, size = 0x4, offset = 0x4, fixed_abs, tag = 'smem constant byte address 0x4 - core index']
  #allocation1 [shape = 'u32[144,128]{1,0:T(1,128)}', space=vmem, size = 0x12000, scoped, tag = 'internal scratch']
  %s0 = inlined_call_operand.hbm [shape: f32[2,125], index: 0, kind: input, shape index: {}]
  %s1 = inlined_call_operand.vmem [shape: bf16[125,144], index: 1, kind: input, shape index: {}]
  %s2 = inlined_call_operand.hbm [shape: f32[1,144], index: 2, kind: input, shape index: {}]
  %s3 = inlined_call_operand.vmem [shape: bf16[144,256], index: 3, kind: input, shape index: {}]
  %s4 = inlined_call_operand.hbm [shape: f32[1,256], index: 4, kind: input, shape index: {}]
  %s5 = inlined_call_operand.vmem [shape: bf16[256,128], index: 5, kind: input, shape index: {}]
  %s6 = inlined_call_operand.vmem [shape: f32[1,128], index: 6, kind: input, shape index: {}]
  %s7 = inlined_call_operand.vmem [shape: bf16[128,8], index: 7, kind: input, shape index: {}]
  %s8 = inlined_call_operand.vmem [shape: f32[1,8], index: 8, kind: input, shape index: {}]
  %s9 = inlined_call_operand.hbm [shape: f32[2,8], index: 9, kind: output, shape index: {}]
  %s10 = sld [smem:[#allocation0]]
  $region58: #{tpu_custom_call.1} parent=0
    _
  %s12 = ssub.s32 1, %s10
  %s13 = scalar_select 0, %s12, %s10
  $region1: #{tpu_custom_call.1} parent=0
    #allocation2 [shape = 'u8[1024]{0}', space=vmem, size = 0x400, scoped, tag = 'input window, operand 0, single buffered']
    #allocation3 [shape = 's32[1]{0}', space=sflag, size = 0x4, scoped, tag = 'scoped memory for tpu_custom_call.1']
    #allocation4 [shape = 's32[1]{0}', space=sflag, size = 0x4, scoped, tag = 'scoped memory for tpu_custom_call.1']
    #allocation5 [shape = 'u8[1024]{0}', space=vmem, size = 0x400, scoped, tag = 'input window, operand 2, single buffered']
    #allocation6 [shape = 's32[1]{0}', space=sflag, size = 0x4, scoped, tag = 'scoped memory for tpu_custom_call.1']
    #allocation7 [shape = 'u8[1024]{0}', space=vmem, size = 0x400, scoped, tag = 'input window, operand 4, single buffered']
    #allocation8 [shape = 'u8[1024]{0}', space=vmem, size = 0x400, scoped, tag = 'output window, operand 0, single buffered']
    %14 = vsyncpa [#allocation3], 0
    %15 = vsyncpa [#allocation6], 0
    %16 = vsyncpa [#allocation4], 0
    // Predicated region
    $region2: #{tpu_custom_call.1} parent=1 // pred_check
      _
    $region3: #{tpu_custom_call.1} parent=1 // pred_check_branch
      %18 = sbr.rel (0) target = $region5
    $region4: #{tpu_custom_call.1} parent=1 // pred_region
      %s20 = ssub.s32 32, 32
      %21 = vsyncadd [#allocation3], %s20
      %s23 = sshll.u32 [#allocation2], 4
      %s24 = int_to_ptr.vmem [resolvable:$true] %s23
      %26 = dma.hbm_to_vmem [thread:$0]  %s0, 32, %s24, [#allocation3]
    $region5: #{tpu_custom_call.1} parent=1 // pred_fallthru
      _
    // Predicated region
    $region6: #{tpu_custom_call.1} parent=1 // pred_check
      _
    $region7: #{tpu_custom_call.1} parent=1 // pred_check_branch
      %28 = sbr.rel (0) target = $region9
    $region8: #{tpu_custom_call.1} parent=1 // pred_region
      _
    $region9: #{tpu_custom_call.1} parent=1 // pred_fallthru
      _
    // Predicated region
    $region10: #{tpu_custom_call.1} parent=1 // pred_check
      _
    $region11: #{tpu_custom_call.1} parent=1 // pred_check_branch
      %30 = sbr.rel (0) target = $region13
    $region12: #{tpu_custom_call.1} parent=1 // pred_region
      %s32 = ssub.s32 32, 32
      %33 = vsyncadd [#allocation6], %s32
      %s35 = sshll.u32 [#allocation5], 4
      %s36 = int_to_ptr.vmem [resolvable:$true] %s35
      %38 = dma.hbm_to_vmem [thread:$0]  %s2, 32, %s36, [#allocation6]
    $region13: #{tpu_custom_call.1} parent=1 // pred_fallthru
      _
    // Predicated region
    $region14: #{tpu_custom_call.1} parent=1 // pred_check
      _
    $region15: #{tpu_custom_call.1} parent=1 // pred_check_branch
      %40 = sbr.rel (0) target = $region17
    $region16: #{tpu_custom_call.1} parent=1 // pred_region
      _
    $region17: #{tpu_custom_call.1} parent=1 // pred_fallthru
      _
    // Predicated region
    $region18: #{tpu_custom_call.1} parent=1 // pred_check
      _
    $region19: #{tpu_custom_call.1} parent=1 // pred_check_branch
      %42 = sbr.rel (0) target = $region21
    $region20: #{tpu_custom_call.1} parent=1 // pred_region
      %s44 = ssub.s32 32, 32
      %45 = vsyncadd [#allocation6], %s44
      %s47 = sshll.u32 [#allocation7], 4
      %s48 = int_to_ptr.vmem [resolvable:$true] %s47
      %50 = dma.hbm_to_vmem [thread:$0]  %s4, 32, %s48, [#allocation6]
    $region21: #{tpu_custom_call.1} parent=1 // pred_fallthru
      _
    // Predicated region
    $region22: #{tpu_custom_call.1} parent=1 // pred_check
      _
    $region23: #{tpu_custom_call.1} parent=1 // pred_check_branch
      %52 = sbr.rel (0) target = $region25
    $region24: #{tpu_custom_call.1} parent=1 // pred_region
      _
    $region25: #{tpu_custom_call.1} parent=1 // pred_fallthru
      _
    // Predicated region
    $region26: #{tpu_custom_call.1} parent=1 // pred_check
      _
    $region27: #{tpu_custom_call.1} parent=1 // pred_check_branch
      %54 = sbr.rel (0) target = $region29
    $region28: #{tpu_custom_call.1} parent=1 // pred_region
      _
    $region29: #{tpu_custom_call.1} parent=1 // pred_fallthru
      _
    // Predicated region
    $region30: #{tpu_custom_call.1} parent=1 // pred_check
      _
    $region31: #{tpu_custom_call.1} parent=1 // pred_check_branch
      %56 = sbr.rel (0) target = $region33
    $region32: #{tpu_custom_call.1} parent=1 // pred_region
      _
    $region33: #{tpu_custom_call.1} parent=1 // pred_fallthru
      _
    // Predicated region
    $region34: #{tpu_custom_call.1} parent=1 // pred_check
      _
    $region35: #{tpu_custom_call.1} parent=1 // pred_check_branch
      %58 = sbr.rel (0) target = $region37
    $region36: #{tpu_custom_call.1} parent=1 // pred_region
      _
    $region37: #{tpu_custom_call.1} parent=1 // pred_fallthru
      _
    // Predicated region
    $region38: #{tpu_custom_call.1} parent=1 // pred_check
      _
    $region39: #{tpu_custom_call.1} parent=1 // pred_check_branch
      %60 = sbr.rel (0) target = $region41
    $region40: #{tpu_custom_call.1} parent=1 // pred_region
      %61 = dma.done [#allocation3], 32
    $region41: #{tpu_custom_call.1} parent=1 // pred_fallthru
      _
    // Predicated region
    $region42: #{tpu_custom_call.1} parent=1 // pred_check
      _
    $region43: #{tpu_custom_call.1} parent=1 // pred_check_branch
      %63 = sbr.rel (0) target = $region45
    $region44: #{tpu_custom_call.1} parent=1 // pred_region
      %64 = dma.done [#allocation6], 32
    $region45: #{tpu_custom_call.1} parent=1 // pred_fallthru
      _
    // Predicated region
    $region46: #{tpu_custom_call.1} parent=1 // pred_check
      _
    $region47: #{tpu_custom_call.1} parent=1 // pred_check_branch
      %66 = sbr.rel (0) target = $region49
    $region48: #{tpu_custom_call.1} parent=1 // pred_region
      %67 = dma.done [#allocation6], 32
    $region49: #{tpu_custom_call.1} parent=1 // pred_fallthru
      _
    %v69 = vld [vmem:[#allocation2] sm:$0x3]
    %v70 = vpack.c.bf16 %v69, %v69
    %v71 = vld [vmem:[%s1] sm:$0xff]
    %v72 = vld [vmem:[%s1 + $0x8] sm:$0xff]
    %v73 = vld [vmem:[%s1 + $0x10] sm:$0xff]
    %v74 = vld [vmem:[%s1 + $0x18] sm:$0xff]
    %v75 = vld [vmem:[%s1 + $0x20] sm:$0xff]
    %v76 = vld [vmem:[%s1 + $0x28] sm:$0xff]
    %v77 = vld [vmem:[%s1 + $0x30] sm:$0xff]
    %v78 = vld [vmem:[%s1 + $0x38] sm:$0xff]
    %v79 = vld [vmem:[%s1 + $0x40] sm:$0xff]
    %v80 = vld [vmem:[%s1 + $0x48] sm:$0xff]
    %v81 = vld [vmem:[%s1 + $0x50] sm:$0xff]
    %v82 = vld [vmem:[%s1 + $0x58] sm:$0xff]
    %v83 = vld [vmem:[%s1 + $0x60] sm:$0xff]
    %v84 = vld [vmem:[%s1 + $0x68] sm:$0xff]
    %v85 = vld [vmem:[%s1 + $0x70] sm:$0xff]
    %v86 = vld [vmem:[%s1 + $0x78] sm:$0x77]
    %v87 = vld [vmem:[#allocation5] sm:$0x3]
    %v89 = vlaneseq
    %v90 = vshrl.u32 %v89, 7
    %v91 = vsub.s32 0, %v90
    %v92 = vrot.slane %v87, %v91
    %v93 = vlaneseq
    %v94 = vshrl.u32 %v93, 7
    %v95 = vsub.s32 1, %v94
    %v96 = vrot.slane %v87, %v95
    %v115 = vunpack.c.l.b16 %v71
    %v116 = vunpack.c.h.b16 %v71
    %v117 = vunpack.c.l.b16 %v72
    %v118 = vunpack.c.h.b16 %v72
    %v119 = vunpack.c.l.b16 %v73
    %v120 = vunpack.c.h.b16 %v73
    %v121 = vunpack.c.l.b16 %v74
    %v122 = vunpack.c.h.b16 %v74
    %v123 = vunpack.c.l.b16 %v75
    %v124 = vunpack.c.h.b16 %v75
    %v125 = vunpack.c.l.b16 %v76
    %v126 = vunpack.c.h.b16 %v76
    %v127 = vunpack.c.l.b16 %v77
    %v128 = vunpack.c.h.b16 %v77
    %v129 = vunpack.c.l.b16 %v78
    %v130 = vunpack.c.h.b16 %v78
    %v131 = vunpack.c.l.b16 %v79
    %v132 = vunpack.c.h.b16 %v79
    %v133 = vunpack.c.l.b16 %v80
    %v134 = vunpack.c.h.b16 %v80
    %v135 = vunpack.c.l.b16 %v81
    %v136 = vunpack.c.h.b16 %v81
    %v137 = vunpack.c.l.b16 %v82
    %v138 = vunpack.c.h.b16 %v82
    %v139 = vunpack.c.l.b16 %v83
    %v140 = vunpack.c.h.b16 %v83
    %v141 = vunpack.c.l.b16 %v84
    %v142 = vunpack.c.h.b16 %v84
    %v143 = vunpack.c.l.b16 %v85
    %v144 = vunpack.c.h.b16 %v85
    %v145 = vunpack.c.l.b16 %v86
    %v146 = vunpack.c.h.b16 %v86
    %v147 = vpack.c.b16 %v117, %v115
    %v148 = vpack.c.b16 %v118, %v116
    %v149 = vpack.c.b16 %v121, %v119
    %v150 = vpack.c.b16 %v122, %v120
    %v151 = vpack.c.b16 %v125, %v123
    %v152 = vpack.c.b16 %v126, %v124
    %v153 = vpack.c.b16 %v129, %v127
    %v154 = vpack.c.b16 %v130, %v128
    %v155 = vpack.c.b16 %v133, %v131
    %v156 = vpack.c.b16 %v134, %v132
    %v157 = vpack.c.b16 %v137, %v135
    %v158 = vpack.c.b16 %v138, %v136
    %v159 = vpack.c.b16 %v141, %v139
    %v160 = vpack.c.b16 %v142, %v140
    %v161 = vpack.c.b16 %v145, %v143
    %v162 = vpack.c.b16 %v146, %v144
    %vm177 = vcmask 1022976
    %v179 = vsel %vm177, %v70, 0
    %vm181 = vcmask 1045504
    %vm182 = vcmask 1046528
    %v183 = vsel %vm181, 4294967295, 65535
    %v184 = vsel %vm182, %v183, 0
    %v186 = vand.u32 %v161, %v184
    %v189 = vand.u32 %v162, %v184
    %191 = vmatprep.subr.bf16.mxu0 %v189
    %192 = vmatpush1.bf16.msra.mxu0 %v186
    %193 = vmatprep.subr.bf16.mxu0 %v160
    %194 = vmatpush1.bf16.msra.mxu0 %v159
    %195 = vmatprep.subr.bf16.mxu0 %v158
    %196 = vmatpush1.bf16.msra.mxu0 %v157
    %197 = vmatprep.subr.bf16.mxu0 %v156
    %198 = vmatpush1.bf16.msra.mxu0 %v155
    %199 = vmatprep.subr.bf16.mxu0 %v154
    %200 = vmatpush1.bf16.msra.mxu0 %v153
    %201 = vmatprep.subr.bf16.mxu0 %v152
    %202 = vmatpush1.bf16.msra.mxu0 %v151
    %203 = vmatprep.subr.bf16.mxu0 %v150
    %204 = vmatpush1.bf16.msra.mxu0 %v149
    %205 = vmatprep.subr.bf16.mxu0 %v148
    %206 = vmatpush1.bf16.msra.mxu0 %v147
    %207 = vmatprep.subr.bf16.mxu0 0
    %208 = vmatpush2.bf16.msra.mxu0 0
    %209 = vmatprep.subr.bf16.mxu0 0
    %210 = vmatpush2.bf16.msra.mxu0 0
    %211 = vmatprep.subr.bf16.mxu0 0
    %212 = vmatpush2.bf16.msra.mxu0 0
    %213 = vmatprep.subr.bf16.mxu0 0
    %214 = vmatpush2.bf16.msra.mxu0 0
    %215 = vmatprep.subr.bf16.mxu0 0
    %216 = vmatpush2.bf16.msra.mxu0 0
    %217 = vmatprep.subr.bf16.mxu0 0
    %218 = vmatpush2.bf16.msra.mxu0 0
    %219 = vmatprep.subr.bf16.mxu0 0
    %220 = vmatpush2.bf16.msra.mxu0 0
    %221 = vmatprep.subr.bf16.mxu0 0
    %222 = vmatpush2.bf16.msra.mxu0 0
    %223 = vmatprep.mubr.bf16.mxu0 0
    %224 = vmatmul.mubr.bf16.gmra.mxu0 %v179
    %v225 = vpop.f32.mrf.mxu0
    %v226 = vadd.f32 %v92, %v225
    %v227 = vpop.f32.mrf.mxu0
    %v228 = vadd.f32 %v96, %v227
    %v229 = vpop.f32.mrf.mxu0
    %v230 = vpop.f32.mrf.mxu0
    %231 = vdwg.mxu0
    %v232 = vmax.f32 %v226, 0.0
    %v233 = vmax.f32 %v228, 0.0
    %v234 = vpack.c.bf16 %v232, %v232
    %v235 = vpack.c.bf16 %v233, %v233
    %v236 = vld [vmem:[%s3] sm:$0xff]
    %v237 = vld [vmem:[%s3 + $0x8] sm:$0xff]
    %v238 = vld [vmem:[%s3 + $0x10] sm:$0xff]
    %v239 = vld [vmem:[%s3 + $0x18] sm:$0xff]
    %v240 = vld [vmem:[%s3 + $0x20] sm:$0xff]
    %v241 = vld [vmem:[%s3 + $0x28] sm:$0xff]
    %v242 = vld [vmem:[%s3 + $0x30] sm:$0xff]
    %v243 = vld [vmem:[%s3 + $0x38] sm:$0xff]
    %v244 = vld [vmem:[%s3 + $0x40] sm:$0xff]
    %v245 = vld [vmem:[%s3 + $0x48] sm:$0xff]
    %v246 = vld [vmem:[%s3 + $0x50] sm:$0xff]
    %v247 = vld [vmem:[%s3 + $0x58] sm:$0xff]
    %v248 = vld [vmem:[%s3 + $0x60] sm:$0xff]
    %v249 = vld [vmem:[%s3 + $0x68] sm:$0xff]
    %v250 = vld [vmem:[%s3 + $0x70] sm:$0xff]
    %v251 = vld [vmem:[%s3 + $0x78] sm:$0xff]
    %v252 = vld [vmem:[%s3 + $0x80] sm:$0xff]
    %v253 = vld [vmem:[%s3 + $0x88] sm:$0xff]
    %v254 = vld [vmem:[#allocation7] sm:$0x3]
    %v256 = vlaneseq
    %v257 = vshrl.u32 %v256, 7
    %v258 = vsub.s32 0, %v257
    %v259 = vrot.slane %v254, %v258
    %v260 = vlaneseq
    %v261 = vshrl.u32 %v260, 7
    %v262 = vsub.s32 1, %v261
    %v263 = vrot.slane %v254, %v262
    %v284 = vunpack.c.l.b16 %v236
    %v285 = vunpack.c.h.b16 %v236
    %v286 = vunpack.c.l.b16 %v237
    %v287 = vunpack.c.h.b16 %v237
    %v288 = vunpack.c.l.b16 %v238
    %v289 = vunpack.c.h.b16 %v238
    %v290 = vunpack.c.l.b16 %v239
    %v291 = vunpack.c.h.b16 %v239
    %v292 = vunpack.c.l.b16 %v240
    %v293 = vunpack.c.h.b16 %v240
    %v294 = vunpack.c.l.b16 %v241
    %v295 = vunpack.c.h.b16 %v241
    %v296 = vunpack.c.l.b16 %v242
    %v297 = vunpack.c.h.b16 %v242
    %v298 = vunpack.c.l.b16 %v243
    %v299 = vunpack.c.h.b16 %v243
    %v300 = vunpack.c.l.b16 %v244
    %v301 = vunpack.c.h.b16 %v244
    %v302 = vunpack.c.l.b16 %v245
    %v303 = vunpack.c.h.b16 %v245
    %v304 = vunpack.c.l.b16 %v246
    %v305 = vunpack.c.h.b16 %v246
    %v306 = vunpack.c.l.b16 %v247
    %v307 = vunpack.c.h.b16 %v247
    %v308 = vunpack.c.l.b16 %v248
    %v309 = vunpack.c.h.b16 %v248
    %v310 = vunpack.c.l.b16 %v249
    %v311 = vunpack.c.h.b16 %v249
    %v312 = vunpack.c.l.b16 %v250
    %v313 = vunpack.c.h.b16 %v250
    %v314 = vunpack.c.l.b16 %v251
    %v315 = vunpack.c.h.b16 %v251
    %v316 = vunpack.c.l.b16 %v252
    %v317 = vunpack.c.h.b16 %v252
    %v318 = vunpack.c.l.b16 %v253
    %v319 = vunpack.c.h.b16 %v253
    %v320 = vpack.c.b16 %v286, %v284
    %v321 = vpack.c.b16 %v287, %v285
    %v322 = vpack.c.b16 %v290, %v288
    %v323 = vpack.c.b16 %v291, %v289
    %v324 = vpack.c.b16 %v294, %v292
    %v325 = vpack.c.b16 %v295, %v293
    %v326 = vpack.c.b16 %v298, %v296
    %v327 = vpack.c.b16 %v299, %v297
    %v328 = vpack.c.b16 %v302, %v300
    %v329 = vpack.c.b16 %v303, %v301
    %v330 = vpack.c.b16 %v306, %v304
    %v331 = vpack.c.b16 %v307, %v305
    %v332 = vpack.c.b16 %v310, %v308
    %v333 = vpack.c.b16 %v311, %v309
    %v334 = vpack.c.b16 %v314, %v312
    %v335 = vpack.c.b16 %v315, %v313
    %v336 = vpack.c.b16 %v318, %v316
    %v337 = vpack.c.b16 %v319, %v317
    %vm356 = vcmask 130048
    %v358 = vsel %vm356, %v235, 0
    %360 = vmatprep.subr.bf16.mxu0 %v335
    %361 = vmatpush1.bf16.msra.mxu0 %v334
    %362 = vmatprep.subr.bf16.mxu0 %v333
    %363 = vmatpush1.bf16.msra.mxu0 %v332
    %364 = vmatprep.subr.bf16.mxu0 %v331
    %365 = vmatpush1.bf16.msra.mxu0 %v330
    %366 = vmatprep.subr.bf16.mxu0 %v329
    %367 = vmatpush1.bf16.msra.mxu0 %v328
    %368 = vmatprep.subr.bf16.mxu0 %v327
    %369 = vmatpush1.bf16.msra.mxu0 %v326
    %370 = vmatprep.subr.bf16.mxu0 %v325
    %371 = vmatpush1.bf16.msra.mxu0 %v324
    %372 = vmatprep.subr.bf16.mxu0 %v323
    %373 = vmatpush1.bf16.msra.mxu0 %v322
    %374 = vmatprep.subr.bf16.mxu0 %v321
    %375 = vmatpush1.bf16.msra.mxu0 %v320
    %376 = vmatprep.subr.bf16.mxu0 0
    %377 = vmatpush2.bf16.msra.mxu0 0
    %378 = vmatprep.subr.bf16.mxu0 0
    %379 = vmatpush2.bf16.msra.mxu0 0
    %380 = vmatprep.subr.bf16.mxu0 0
    %381 = vmatpush2.bf16.msra.mxu0 0
    %382 = vmatprep.subr.bf16.mxu0 0
    %383 = vmatpush2.bf16.msra.mxu0 0
    %384 = vmatprep.subr.bf16.mxu0 0
    %385 = vmatpush2.bf16.msra.mxu0 0
    %386 = vmatprep.subr.bf16.mxu0 0
    %387 = vmatpush2.bf16.msra.mxu0 0
    %388 = vmatprep.subr.bf16.mxu0 0
    %389 = vmatpush2.bf16.msra.mxu0 0
    %390 = vmatprep.subr.bf16.mxu0 %v337
    %391 = vmatpush2.bf16.msra.mxu0 %v336
    %392 = vmatprep.mubr.bf16.mxu0 %v358
    %393 = vmatmul.mubr.bf16.gmra.mxu0 %v234
    %v394 = vpop.f32.mrf.mxu0
    %v395 = vadd.f32 %v259, %v394
    %v396 = vpop.f32.mrf.mxu0
    %v397 = vadd.f32 %v263, %v396
    %v398 = vpop.f32.mrf.mxu0
    %v399 = vpop.f32.mrf.mxu0
    %400 = vdwg.mxu0
    %v401 = vmax.f32 %v395, 0.0
    %v402 = vmax.f32 %v397, 0.0
    %v403 = vpack.c.bf16 %v401, %v401
    %v404 = vpack.c.bf16 %v402, %v402
    %v405 = vld [vmem:[%s5] sm:$0xf]
    %v406 = vld [vmem:[%s5 + $0x4] sm:$0xf]
    %v407 = vld [vmem:[%s5 + $0x8] sm:$0xf]
    %v408 = vld [vmem:[%s5 + $0xc] sm:$0xf]
    %v409 = vld [vmem:[%s5 + $0x10] sm:$0xf]
    %v410 = vld [vmem:[%s5 + $0x14] sm:$0xf]
    %v411 = vld [vmem:[%s5 + $0x18] sm:$0xf]
    %v412 = vld [vmem:[%s5 + $0x1c] sm:$0xf]
    %v413 = vld [vmem:[%s5 + $0x20] sm:$0xf]
    %v414 = vld [vmem:[%s5 + $0x24] sm:$0xf]
    %v415 = vld [vmem:[%s5 + $0x28] sm:$0xf]
    %v416 = vld [vmem:[%s5 + $0x2c] sm:$0xf]
    %v417 = vld [vmem:[%s5 + $0x30] sm:$0xf]
    %v418 = vld [vmem:[%s5 + $0x34] sm:$0xf]
    %v419 = vld [vmem:[%s5 + $0x38] sm:$0xf]
    %v420 = vld [vmem:[%s5 + $0x3c] sm:$0xf]
    %v421 = vld [vmem:[%s5 + $0x40] sm:$0xf]
    %v422 = vld [vmem:[%s5 + $0x44] sm:$0xf]
    %v423 = vld [vmem:[%s5 + $0x48] sm:$0xf]
    %v424 = vld [vmem:[%s5 + $0x4c] sm:$0xf]
    %v425 = vld [vmem:[%s5 + $0x50] sm:$0xf]
    %v426 = vld [vmem:[%s5 + $0x54] sm:$0xf]
    %v427 = vld [vmem:[%s5 + $0x58] sm:$0xf]
    %v428 = vld [vmem:[%s5 + $0x5c] sm:$0xf]
    %v429 = vld [vmem:[%s5 + $0x60] sm:$0xf]
    %v430 = vld [vmem:[%s5 + $0x64] sm:$0xf]
    %v431 = vld [vmem:[%s5 + $0x68] sm:$0xf]
    %v432 = vld [vmem:[%s5 + $0x6c] sm:$0xf]
    %v433 = vld [vmem:[%s5 + $0x70] sm:$0xf]
    %v434 = vld [vmem:[%s5 + $0x74] sm:$0xf]
    %v435 = vld [vmem:[%s5 + $0x78] sm:$0xf]
    %v436 = vld [vmem:[%s5 + $0x7c] sm:$0xf]
    %v437 = vld [vmem:[%s6] sm:$0x1]
    %v439 = vlaneseq
    %v440 = vshrl.u32 %v439, 7
    %v441 = vsub.s32 0, %v440
    %v442 = vrot.slane %v437, %v441
    %v476 = vunpack.c.l.b16 %v405
    %v477 = vunpack.c.l.b16 %v406
    %v478 = vunpack.c.l.b16 %v407
    %v479 = vunpack.c.l.b16 %v408
    %v480 = vunpack.c.l.b16 %v409
    %v481 = vunpack.c.l.b16 %v410
    %v482 = vunpack.c.l.b16 %v411
    %v483 = vunpack.c.l.b16 %v412
    %v484 = vunpack.c.l.b16 %v413
    %v485 = vunpack.c.l.b16 %v414
    %v486 = vunpack.c.l.b16 %v415
    %v487 = vunpack.c.l.b16 %v416
    %v488 = vunpack.c.l.b16 %v417
    %v489 = vunpack.c.l.b16 %v418
    %v490 = vunpack.c.l.b16 %v419
    %v491 = vunpack.c.l.b16 %v420
    %v492 = vunpack.c.l.b16 %v421
    %v493 = vunpack.c.l.b16 %v422
    %v494 = vunpack.c.l.b16 %v423
    %v495 = vunpack.c.l.b16 %v424
    %v496 = vunpack.c.l.b16 %v425
    %v497 = vunpack.c.l.b16 %v426
    %v498 = vunpack.c.l.b16 %v427
    %v499 = vunpack.c.l.b16 %v428
    %v500 = vunpack.c.l.b16 %v429
    %v501 = vunpack.c.l.b16 %v430
    %v502 = vunpack.c.l.b16 %v431
    %v503 = vunpack.c.l.b16 %v432
    %v504 = vunpack.c.l.b16 %v433
    %v505 = vunpack.c.l.b16 %v434
    %v506 = vunpack.c.l.b16 %v435
    %v507 = vunpack.c.l.b16 %v436
    %v508 = vpack.c.b16 %v477, %v476
    %v509 = vpack.c.b16 %v479, %v478
    %v510 = vpack.c.b16 %v481, %v480
    %v511 = vpack.c.b16 %v483, %v482
    %v512 = vpack.c.b16 %v485, %v484
    %v513 = vpack.c.b16 %v487, %v486
    %v514 = vpack.c.b16 %v489, %v488
    %v515 = vpack.c.b16 %v491, %v490
    %v516 = vpack.c.b16 %v493, %v492
    %v517 = vpack.c.b16 %v495, %v494
    %v518 = vpack.c.b16 %v497, %v496
    %v519 = vpack.c.b16 %v499, %v498
    %v520 = vpack.c.b16 %v501, %v500
    %v521 = vpack.c.b16 %v503, %v502
    %v522 = vpack.c.b16 %v505, %v504
    %v523 = vpack.c.b16 %v507, %v506
    %540 = vmatprep.subr.bf16.mxu0 0
    %541 = vmatpush1.bf16.msra.mxu0 %v515
    %542 = vmatprep.subr.bf16.mxu0 0
    %543 = vmatpush1.bf16.msra.mxu0 %v514
    %544 = vmatprep.subr.bf16.mxu0 0
    %545 = vmatpush1.bf16.msra.mxu0 %v513
    %546 = vmatprep.subr.bf16.mxu0 0
    %547 = vmatpush1.bf16.msra.mxu0 %v512
    %548 = vmatprep.subr.bf16.mxu0 0
    %549 = vmatpush1.bf16.msra.mxu0 %v511
    %550 = vmatprep.subr.bf16.mxu0 0
    %551 = vmatpush1.bf16.msra.mxu0 %v510
    %552 = vmatprep.subr.bf16.mxu0 0
    %553 = vmatpush1.bf16.msra.mxu0 %v509
    %554 = vmatprep.subr.bf16.mxu0 0
    %555 = vmatpush1.bf16.msra.mxu0 %v508
    %556 = vmatprep.subr.bf16.mxu0 0
    %557 = vmatpush2.bf16.msra.mxu0 %v523
    %558 = vmatprep.subr.bf16.mxu0 0
    %559 = vmatpush2.bf16.msra.mxu0 %v522
    %560 = vmatprep.subr.bf16.mxu0 0
    %561 = vmatpush2.bf16.msra.mxu0 %v521
    %562 = vmatprep.subr.bf16.mxu0 0
    %563 = vmatpush2.bf16.msra.mxu0 %v520
    %564 = vmatprep.subr.bf16.mxu0 0
    %565 = vmatpush2.bf16.msra.mxu0 %v519
    %566 = vmatprep.subr.bf16.mxu0 0
    %567 = vmatpush2.bf16.msra.mxu0 %v518
    %568 = vmatprep.subr.bf16.mxu0 0
    %569 = vmatpush2.bf16.msra.mxu0 %v517
    %570 = vmatprep.subr.bf16.mxu0 0
    %571 = vmatpush2.bf16.msra.mxu0 %v516
    %572 = vmatprep.mubr.bf16.mxu0 %v404
    %573 = vmatmul.mubr.bf16.gmra.mxu0 %v403
    %v574 = vpop.f32.mrf.mxu0
    %v575 = vadd.f32 %v442, %v574
    %v576 = vpop.f32.mrf.mxu0
    %v577 = vpop.f32.mrf.mxu0
    %v578 = vpop.f32.mrf.mxu0
    %579 = vdwg.mxu0
    %v580 = vmax.f32 %v575, 0.0
    %v581 = vpack.c.bf16 %v580, %v580
    %v582 = vld [vmem:[%s7] sm:$0xf]
    %v583 = vld [vmem:[%s7 + $0x4] sm:$0xf]
    %v584 = vld [vmem:[%s7 + $0x8] sm:$0xf]
    %v585 = vld [vmem:[%s7 + $0xc] sm:$0xf]
    %v586 = vld [vmem:[%s7 + $0x10] sm:$0xf]
    %v587 = vld [vmem:[%s7 + $0x14] sm:$0xf]
    %v588 = vld [vmem:[%s7 + $0x18] sm:$0xf]
    %v589 = vld [vmem:[%s7 + $0x1c] sm:$0xf]
    %v590 = vld [vmem:[%s7 + $0x20] sm:$0xf]
    %v591 = vld [vmem:[%s7 + $0x24] sm:$0xf]
    %v592 = vld [vmem:[%s7 + $0x28] sm:$0xf]
    %v593 = vld [vmem:[%s7 + $0x2c] sm:$0xf]
    %v594 = vld [vmem:[%s7 + $0x30] sm:$0xf]
    %v595 = vld [vmem:[%s7 + $0x34] sm:$0xf]
    %v596 = vld [vmem:[%s7 + $0x38] sm:$0xf]
    %v597 = vld [vmem:[%s7 + $0x3c] sm:$0xf]
    %v598 = vld [vmem:[%s8] sm:$0x1]
    %v600 = vlaneseq
    %v601 = vshrl.u32 %v600, 7
    %v602 = vsub.s32 0, %v601
    %v603 = vrot.slane %v598, %v602
    %v621 = vunpack.c.l.b16 %v582
    %v622 = vunpack.c.l.b16 %v583
    %v623 = vunpack.c.l.b16 %v584
    %v624 = vunpack.c.l.b16 %v585
    %v625 = vunpack.c.l.b16 %v586
    %v626 = vunpack.c.l.b16 %v587
    %v627 = vunpack.c.l.b16 %v588
    %v628 = vunpack.c.l.b16 %v589
    %v629 = vunpack.c.l.b16 %v590
    %v630 = vunpack.c.l.b16 %v591
    %v631 = vunpack.c.l.b16 %v592
    %v632 = vunpack.c.l.b16 %v593
    %v633 = vunpack.c.l.b16 %v594
    %v634 = vunpack.c.l.b16 %v595
    %v635 = vunpack.c.l.b16 %v596
    %v636 = vunpack.c.l.b16 %v597
    %v637 = vpack.c.b16 %v622, %v621
    %v638 = vpack.c.b16 %v624, %v623
    %v639 = vpack.c.b16 %v626, %v625
    %v640 = vpack.c.b16 %v628, %v627
    %v641 = vpack.c.b16 %v630, %v629
    %v642 = vpack.c.b16 %v632, %v631
    %v643 = vpack.c.b16 %v634, %v633
    %v644 = vpack.c.b16 %v636, %v635
    %653 = vmatprep.subr.bf16.mxu0 0
    %654 = vmatpush1.bf16.msra.mxu0 %v644
    %655 = vmatprep.subr.bf16.mxu0 0
    %656 = vmatpush1.bf16.msra.mxu0 %v643
    %657 = vmatprep.subr.bf16.mxu0 0
    %658 = vmatpush1.bf16.msra.mxu0 %v642
    %659 = vmatprep.subr.bf16.mxu0 0
    %660 = vmatpush1.bf16.msra.mxu0 %v641
    %661 = vmatprep.subr.bf16.mxu0 0
    %662 = vmatpush1.bf16.msra.mxu0 %v640
    %663 = vmatprep.subr.bf16.mxu0 0
    %664 = vmatpush1.bf16.msra.mxu0 %v639
    %665 = vmatprep.subr.bf16.mxu0 0
    %666 = vmatpush1.bf16.msra.mxu0 %v638
    %667 = vmatprep.subr.bf16.mxu0 0
    %668 = vmatpush1.bf16.msra.mxu0 %v637
    %669 = vmatprep.subr.bf16.mxu0 0
    %670 = vmatpush2.bf16.msra.mxu0 0
    %671 = vmatprep.subr.bf16.mxu0 0
    %672 = vmatpush2.bf16.msra.mxu0 0
    %673 = vmatprep.subr.bf16.mxu0 0
    %674 = vmatpush2.bf16.msra.mxu0 0
    %675 = vmatprep.subr.bf16.mxu0 0
    %676 = vmatpush2.bf16.msra.mxu0 0
    %677 = vmatprep.subr.bf16.mxu0 0
    %678 = vmatpush2.bf16.msra.mxu0 0
    %679 = vmatprep.subr.bf16.mxu0 0
    %680 = vmatpush2.bf16.msra.mxu0 0
    %681 = vmatprep.subr.bf16.mxu0 0
    %682 = vmatpush2.bf16.msra.mxu0 0
    %683 = vmatprep.subr.bf16.mxu0 0
    %684 = vmatpush2.bf16.msra.mxu0 0
    %685 = vmatprep.mubr.bf16.mxu0 0
    %686 = vmatmul.mubr.bf16.gmra.mxu0 %v581
    %v687 = vpop.f32.mrf.mxu0
    %v688 = vadd.f32 %v603, %v687
    %v689 = vpop.f32.mrf.mxu0
    %v690 = vpop.f32.mrf.mxu0
    %v691 = vpop.f32.mrf.mxu0
    %692 = vdwg.mxu0
    %v693 = vxor.u32 %v688, 2147483648
    %v694 = vmul.f32 %v693, 1.442695
    %v695 = vpow.pop %v694
    %v696 = vadd.f32 %v695, 1.0
    %v697 = vrcp.pop %v696
    %v698 = vmul.f32 1.0, %v697
    %vm699 = vcmask 58368
    %700 = vst.msk [vmem:[#allocation8] sm:$0x3] %vm699, %v698
    // Predicated region
    $region50: #{tpu_custom_call.1} parent=1 // pred_check
      _
    $region51: #{tpu_custom_call.1} parent=1 // pred_check_branch
      %702 = sbr.rel (0) target = $region53
    $region52: #{tpu_custom_call.1} parent=1 // pred_region
      %s704 = ssub.s32 32, 32
      %705 = vsyncadd [#allocation4], %s704
      %s707 = sshll.u32 [#allocation8], 4
      %s708 = int_to_ptr.vmem [resolvable:$true] %s707
      %710 = dma.vmem_to_hbm [thread:$0]  %s708, 32, %s9, [#allocation4]
    $region53: #{tpu_custom_call.1} parent=1 // pred_fallthru
      _
    // Predicated region
    $region54: #{tpu_custom_call.1} parent=1 // pred_check
      _
    $region55: #{tpu_custom_call.1} parent=1 // pred_check_branch
      %712 = sbr.rel (0) target = $region57
    $region56: #{tpu_custom_call.1} parent=1 // pred_region
      %713 = dma.done [#allocation4], 32
    $region57: #{tpu_custom_call.1} parent=1 // pred_fallthru
      _
    %714 = vsyncpa [#allocation3], 1
    %715 = vsyncpa [#allocation6], 1
    %716 = vsyncpa [#allocation4], 1

</llo_original>
